<compile_context>
chip_gen: v6e
topology: v6e:2x2x1
jax: 0.10.0
libtpu: 0.0.40
codegen_flags: <defaults>
</compile_context>

<pallas_src>
import math
from functools import partial

import jax
import jax.numpy as jnp
from jax.experimental import pallas as pl
from jax.experimental.pallas import tpu as pltpu


def _round_up(v, m):
    return ((v + m - 1) // m) * m


def _cdiv(a, b):
    return -(-a // b)


def _dice_kernel(x_ref, y_ref, tp_ref, s_ref, tp_acc, s_acc, *,
                 S, TS, n_s_inner, thr, x_is_float, needs_mask):
    # x_ref, y_ref: (TR, TS) tiles.  tp_ref/s_ref: (TR, 1) per-row partial
    # reductions for this (row-tile, spatial-part) pair, written on the last
    # step of the trailing reduction axis.  tp_acc/s_acc: (TR, 1) f32 VMEM
    # accumulators resident across that axis.
    p = pl.program_id(1)
    k = pl.program_id(2)

    @pl.when(k == 0)
    def _():
        tp_acc[...] = jnp.zeros_like(tp_acc)
        s_acc[...] = jnp.zeros_like(s_acc)

    x = x_ref[...]
    y = y_ref[...]
    if x_is_float:
        hit = x >= jnp.asarray(thr, dtype=x.dtype)      # compare in x's dtype
    else:
        hit = x.astype(jnp.float32) >= jnp.float32(thr)  # int x: exact in f32

    def accumulate(hit_t, y_t):
        # tp += sum(y where hit) ; s += sum(y) + count(hit)   (all f32 accum)
        tp_acc[...] += jnp.sum(jnp.where(hit_t, y_t, jnp.zeros_like(y_t)),
                               axis=-1, keepdims=True, dtype=jnp.float32)
        s_acc[...] += (jnp.sum(y_t, axis=-1, keepdims=True, dtype=jnp.float32)
                       + jnp.sum(hit_t, axis=-1, keepdims=True,
                                 dtype=jnp.float32))

    if needs_mask:
        # Logical start column of this tile (independent of the clamped DMA).
        c0 = (p * n_s_inner + k) * TS

        @pl.when(c0 + TS <= S)            # full, fully in-range tile
        def _():
            accumulate(hit, y)

        @pl.when(c0 + TS > S)             # ragged tail / phantom tile
        def _():
            lane = jax.lax.broadcasted_iota(jnp.int32, hit.shape, 1)
            valid = (lane + c0) < S
            accumulate(jnp.logical_and(hit, valid),
                       jnp.where(valid, y, jnp.zeros_like(y)))
    else:
        accumulate(hit, y)

    @pl.when(k == pl.num_programs(2) - 1)
    def _():
        tp_ref[...] = tp_acc[...]
        s_ref[...] = s_acc[...]


def dice_loss(x, y, *, smooth=1.0, tresh=0.5, activate=True, loss=False):
    """Pallas implementation of DiceLoss.forward with dims=(-2, -1)."""
    if tresh is None:
        # TODO(synk): tresh=None -> torch.argmax(x, dim=1) path not implemented.
        raise NotImplementedError("tresh=None (argmax) path not implemented")

    B, C, H, W = x.shape
    R, S = B * C, H * W
    xr = x.reshape(R, S)
    yr = y.reshape(R, S)

    # sigmoid(x) >= tresh  <=>  x >= logit(tresh); skip the sigmoid entirely.
    if activate:
        t = min(max(float(tresh), 1e-12), 1.0 - 1e-12)
        thr = math.log(t / (1.0 - t))
    else:
        thr = float(tresh)
    x_is_float = bool(jnp.issubdtype(xr.dtype, jnp.floating))

    # ---- tile selection: rows first, then spatial from the byte budget ----
    SUB, LANE = 8, 128
    target_bytes = 4 << 20                      # ~4 MiB per input tile
    itemsize = max(xr.dtype.itemsize, yr.dtype.itemsize)

    TR = min(_round_up(R, SUB), 256)
    TS = (target_bytes // (TR * itemsize)) // LANE * LANE
    TS = max(LANE, min(TS, _round_up(S, LANE)))
    if TS >= _round_up(S, LANE):
        # whole spatial extent fits in one tile: spend leftover budget on rows
        TR = max(TR, min(_round_up(R, SUB),
                         (target_bytes // (TS * itemsize)) // SUB * SUB,
                         1024))

    n_r = _cdiv(R, TR)
    n_s = _cdiv(S, TS)
    if n_r == 1 and n_s == 1 and S > LANE:
        # make the grid splittable across v7x's two TensorCores
        TS = _round_up(_cdiv(S, 2), LANE)
        n_s = _cdiv(S, TS)

    if n_r >= 2 or n_s < 2:
        P, n_s_inner = 1, n_s                   # rows already give parallelism
    else:
        P, n_s_inner = 2, _cdiv(n_s, 2)         # split spatial axis across TCs

    needs_mask = (S % TS != 0) or (P * n_s_inner != n_s)
    R_out = n_r * TR
    grid = (n_r, P, n_s_inner)

    def in_map(i, p, k):
        # Clamp so phantom tiles (odd n_s split) never DMA out of bounds; their
        # contribution is zeroed by the in-kernel lane mask instead.
        return (i, jnp.minimum(p * n_s_inner + k, n_s - 1))

    kernel = partial(_dice_kernel, S=S, TS=TS, n_s_inner=n_s_inner,
                     thr=thr, x_is_float=x_is_float, needs_mask=needs_mask)

    in_step_bytes = TR * TS * (xr.dtype.itemsize + yr.dtype.itemsize)
    vmem_bytes = int(min(max(2 * in_step_bytes + (8 << 20), 32 << 20), 48 << 20))

    cost = pl.CostEstimate(
        flops=4 * R * S,
        transcendentals=0,
        bytes_accessed=R * S * (xr.dtype.itemsize + yr.dtype.itemsize)
        + 2 * P * R_out * 4,
    )

    out_sds = jax.ShapeDtypeStruct((P, R_out, 1), jnp.float32)
    tp_parts, s_parts = pl.pallas_call(
        kernel,
        out_shape=(out_sds, out_sds),
        grid_spec=pltpu.PrefetchScalarGridSpec(
            num_scalar_prefetch=0,
            grid=grid,
            in_specs=[
                pl.BlockSpec((TR, TS), in_map),
                pl.BlockSpec((TR, TS), in_map),
            ],
            out_specs=[
                pl.BlockSpec((None, TR, 1), lambda i, p, k: (p, i, 0)),
                pl.BlockSpec((None, TR, 1), lambda i, p, k: (p, i, 0)),
            ],
            scratch_shapes=[
                pltpu.VMEM((TR, 1), jnp.float32),   # tp accumulator
                pltpu.VMEM((TR, 1), jnp.float32),   # s = 2tp+fp+fn accumulator
            ],
        ),
        compiler_params=pltpu.CompilerParams(
            dimension_semantics=("parallel", "parallel", "arbitrary"),
            vmem_limit_bytes=vmem_bytes,
        ),
        cost_estimate=cost,
    )(xr, yr)

    # Finalize in the wrapper (tiny): combine spatial-part partials, drop
    # garbage rows from ragged row tiles, compute dice, mean.
    tp = jnp.sum(tp_parts[:, :R, 0], axis=0)           # (R,)
    s = jnp.sum(s_parts[:, :R, 0], axis=0)             # (R,) = 2tp + fp + fn
    dc = jnp.mean((2.0 * tp + smooth) / (s + smooth))
    return (1.0 - dc) if loss else dc


def _dice_loss_ref(x, y, *, smooth=1.0, tresh=0.5, activate=True, loss=False):
    """Pure-JAX reference mirroring the PyTorch forward."""
    x = x.astype(jnp.float32)
    y = y.astype(jnp.float32)
    if activate:
        x = jax.nn.sigmoid(x)
    x = (x >= tresh).astype(jnp.float32)
    dims = (-2, -1)
    tp = (x * y).sum(dims)
    fp = (x * (1.0 - y)).sum(dims)
    fn = ((1.0 - x) * y).sum(dims)
    dc = (2.0 * tp + smooth) / (2.0 * tp + fp + fn + smooth)
    dc = dc.mean()
    return (1.0 - dc) if loss else dc


if __name__ == "__main__":
    key = jax.random.PRNGKey(0)

    cases = [
        # (shape, smooth, tresh, activate, loss)
        ((2, 4, 16, 16), 1.0, 0.5, True, False),   # lane-aligned spatial dim
        ((2, 3, 17, 23), 1.0, 0.5, True, True),    # ragged rows + ragged spatial tail
        ((2, 4, 16, 16), 1.0, 0.3, False, False),  # no sigmoid, non-trivial threshold
    ]
    for shape, smooth, tresh, activate, loss in cases:
        key, kx, ky = jax.random.split(key, 3)
        x = jax.random.normal(kx, shape, dtype=jnp.float32)                 # logits
        y = jax.random.bernoulli(ky, p=0.5, shape=shape).astype(jnp.float32)

        out = jax.block_until_ready(
            dice_loss(x, y, smooth=smooth, tresh=tresh,
                      activate=activate, loss=loss))
        ref = _dice_loss_ref(x, y, smooth=smooth, tresh=tresh,
                             activate=activate, loss=loss)
        assert jnp.allclose(out, ref, atol=1e-5, rtol=1e-5), (shape, out, ref)

    print("KERNEL_OK")
</pallas_src>

<mosaic_0001>
module attributes {stable_mosaic.version = 11 : i64} {
  func.func @_dice_kernel(%arg0: i32, %arg1: i32, %arg2: i32, %arg3: memref<8x128xf32, #tpu.memory_space<vmem>>, %arg4: memref<8x128xf32, #tpu.memory_space<vmem>>, %arg5: memref<1x8x1xf32, #tpu.memory_space<vmem>>, %arg6: memref<1x8x1xf32, #tpu.memory_space<vmem>>, %arg7: memref<8x1xf32, #tpu.memory_space<vmem>>, %arg8: memref<8x1xf32, #tpu.memory_space<vmem>>) attributes {dimension_semantics = [#tpu.dimension_semantics<parallel>, #tpu.dimension_semantics<parallel>, #tpu.dimension_semantics<arbitrary>], iteration_bounds = array<i64: 1, 2, 1>, scalar_prefetch = 0 : i64, scratch_operands = 2 : i64, tpu.core_type = #tpu.core_type<tc>, window_params = [{transform_indices = @transform_0, window_bounds = array<i64: 8, 128>}, {transform_indices = @transform_1, window_bounds = array<i64: 8, 128>}, {transform_indices = @transform_2, window_bounds = array<i64: 1, 8, 1>}, {transform_indices = @transform_3, window_bounds = array<i64: 1, 8, 1>}]} {
    %c0_i32 = arith.constant 0 : i32
    %0 = arith.cmpi eq, %arg2, %c0_i32 : i32
    %1 = arith.extui %0 : i1 to i32
    %c0_i32_0 = arith.constant 0 : i32
    %2 = arith.cmpi ne, %1, %c0_i32_0 : i32
    scf.if %2 {
      %cst_18 = arith.constant 0.000000e+00 : f32
      %27 = vector.broadcast %cst_18 : f32 to vector<8x1xf32>
      %c0_19 = arith.constant 0 : index
      %c0_20 = arith.constant 0 : index
      %28 = vector.load %arg7[%c0_19, %c0_20] : memref<8x1xf32, #tpu.memory_space<vmem>>, vector<8x1xf32>
      tpu.vector_store %arg7[%c0_19, %c0_20], %27 {strides = array<i32>} : memref<8x1xf32, #tpu.memory_space<vmem>>, vector<8x1xf32>,
      %cst_21 = arith.constant 0.000000e+00 : f32
      %29 = vector.broadcast %cst_21 : f32 to vector<8x1xf32>
      %c0_22 = arith.constant 0 : index
      %c0_23 = arith.constant 0 : index
      %30 = vector.load %arg8[%c0_22, %c0_23] : memref<8x1xf32, #tpu.memory_space<vmem>>, vector<8x1xf32>
      tpu.vector_store %arg8[%c0_22, %c0_23], %29 {strides = array<i32>} : memref<8x1xf32, #tpu.memory_space<vmem>>, vector<8x1xf32>,
    } else {
    }
    %c0 = arith.constant 0 : index
    %c0_1 = arith.constant 0 : index
    %3 = vector.load %arg3[%c0, %c0_1] : memref<8x128xf32, #tpu.memory_space<vmem>>, vector<8x128xf32>
    %c0_2 = arith.constant 0 : index
    %c0_3 = arith.constant 0 : index
    %4 = vector.load %arg4[%c0_2, %c0_3] : memref<8x128xf32, #tpu.memory_space<vmem>>, vector<8x128xf32>
    %cst = arith.constant 0.000000e+00 : f32
    %5 = vector.broadcast %cst : f32 to vector<8x128xf32>
    %6 = arith.cmpf oge, %3, %5 : vector<8x128xf32>
    %c0_4 = arith.constant 0 : index
    %c0_5 = arith.constant 0 : index
    %7 = vector.load %arg7[%c0_4, %c0_5] : memref<8x1xf32, #tpu.memory_space<vmem>>, vector<8x1xf32>
    %cst_6 = arith.constant 0.000000e+00 : f32
    %8 = vector.broadcast %cst_6 : f32 to vector<8x128xf32>
    %9 = arith.select %6, %4, %8 : vector<8x128xi1>, vector<8x128xf32>
    %cst_7 = arith.constant dense<0.000000e+00> : vector<8xf32>
    %10 = vector.multi_reduction <add>, %9, %cst_7 [1] : vector<8x128xf32> to vector<8xf32>
    %11 = vector.shape_cast %10 : vector<8xf32> to vector<8x1xf32>
    %12 = arith.addf %7, %11 : vector<8x1xf32>
    %c0_8 = arith.constant 0 : index
    %c0_9 = arith.constant 0 : index
    %13 = vector.load %arg7[%c0_8, %c0_9] : memref<8x1xf32, #tpu.memory_space<vmem>>, vector<8x1xf32>
    tpu.vector_store %arg7[%c0_8, %c0_9], %12 {strides = array<i32>} : memref<8x1xf32, #tpu.memory_space<vmem>>, vector<8x1xf32>,
    %c0_10 = arith.constant 0 : index
    %c0_11 = arith.constant 0 : index
    %14 = vector.load %arg8[%c0_10, %c0_11] : memref<8x1xf32, #tpu.memory_space<vmem>>, vector<8x1xf32>
    %cst_12 = arith.constant dense<0.000000e+00> : vector<8xf32>
    %15 = vector.multi_reduction <add>, %4, %cst_12 [1] : vector<8x128xf32> to vector<8xf32>
    %16 = vector.shape_cast %15 : vector<8xf32> to vector<8x1xf32>
    %17 = arith.extui %6 : vector<8x128xi1> to vector<8x128xi32>
    %18 = arith.sitofp %17 : vector<8x128xi32> to vector<8x128xf32>
    %cst_13 = arith.constant dense<0.000000e+00> : vector<8xf32>
    %19 = vector.multi_reduction <add>, %18, %cst_13 [1] : vector<8x128xf32> to vector<8xf32>
    %20 = vector.shape_cast %19 : vector<8xf32> to vector<8x1xf32>
    %21 = arith.addf %16, %20 : vector<8x1xf32>
    %22 = arith.addf %14, %21 : vector<8x1xf32>
    %c0_14 = arith.constant 0 : index
    %c0_15 = arith.constant 0 : index
    %23 = vector.load %arg8[%c0_14, %c0_15] : memref<8x1xf32, #tpu.memory_space<vmem>>, vector<8x1xf32>
    tpu.vector_store %arg8[%c0_14, %c0_15], %22 {strides = array<i32>} : memref<8x1xf32, #tpu.memory_space<vmem>>, vector<8x1xf32>,
    %c0_i32_16 = arith.constant 0 : i32
    %24 = arith.cmpi eq, %arg2, %c0_i32_16 : i32
    %25 = arith.extui %24 : i1 to i32
    %c0_i32_17 = arith.constant 0 : i32
    %26 = arith.cmpi ne, %25, %c0_i32_17 : i32
    scf.if %26 {
      %c0_18 = arith.constant 0 : index
      %c0_19 = arith.constant 0 : index
      %27 = vector.load %arg7[%c0_18, %c0_19] : memref<8x1xf32, #tpu.memory_space<vmem>>, vector<8x1xf32>
      %c0_20 = arith.constant 0 : index
      %c0_21 = arith.constant 0 : index
      %c0_22 = arith.constant 0 : index
      %28 = vector.load %arg5[%c0_20, %c0_21, %c0_22] : memref<1x8x1xf32, #tpu.memory_space<vmem>>, vector<1x8x1xf32>
      %29 = vector.shape_cast %28 : vector<1x8x1xf32> to vector<8x1xf32>
      %30 = vector.shape_cast %27 : vector<8x1xf32> to vector<1x8x1xf32>
      tpu.vector_store %arg5[%c0_20, %c0_21, %c0_22], %30 {strides = array<i32>} : memref<1x8x1xf32, #tpu.memory_space<vmem>>, vector<1x8x1xf32>,
      %c0_23 = arith.constant 0 : index
      %c0_24 = arith.constant 0 : index
      %31 = vector.load %arg8[%c0_23, %c0_24] : memref<8x1xf32, #tpu.memory_space<vmem>>, vector<8x1xf32>
      %c0_25 = arith.constant 0 : index
      %c0_26 = arith.constant 0 : index
      %c0_27 = arith.constant 0 : index
      %32 = vector.load %arg6[%c0_25, %c0_26, %c0_27] : memref<1x8x1xf32, #tpu.memory_space<vmem>>, vector<1x8x1xf32>
      %33 = vector.shape_cast %32 : vector<1x8x1xf32> to vector<8x1xf32>
      %34 = vector.shape_cast %31 : vector<8x1xf32> to vector<1x8x1xf32>
      tpu.vector_store %arg6[%c0_25, %c0_26, %c0_27], %34 {strides = array<i32>} : memref<1x8x1xf32, #tpu.memory_space<vmem>>, vector<1x8x1xf32>,
    } else {
    }
    return
  }
  func.func @transform_0(%arg0: i32, %arg1: i32, %arg2: i32) -> (i32, i32) {
    %c1_i32 = arith.constant 1 : i32
    %0 = arith.muli %arg1, %c1_i32 : i32
    %1 = arith.addi %0, %arg2 : i32
    %c1_i32_0 = arith.constant 1 : i32
    %2 = arith.minsi %1, %c1_i32_0 : i32
    %c0_i32 = arith.constant 0 : i32
    return %arg0, %2 : i32, i32
  }
  func.func @transform_1(%arg0: i32, %arg1: i32, %arg2: i32) -> (i32, i32) {
    %c1_i32 = arith.constant 1 : i32
    %0 = arith.muli %arg1, %c1_i32 : i32
    %1 = arith.addi %0, %arg2 : i32
    %c1_i32_0 = arith.constant 1 : i32
    %2 = arith.minsi %1, %c1_i32_0 : i32
    %c0_i32 = arith.constant 0 : i32
    return %arg0, %2 : i32, i32
  }
  func.func @transform_2(%arg0: i32, %arg1: i32, %arg2: i32) -> (i32, i32, i32) {
    %c0_i32 = arith.constant 0 : i32
    %c0_i32_0 = arith.constant 0 : i32
    return %arg1, %arg0, %c0_i32 : i32, i32, i32
  }
  func.func @transform_3(%arg0: i32, %arg1: i32, %arg2: i32) -> (i32, i32, i32) {
    %c0_i32 = arith.constant 0 : i32
    %c0_i32_0 = arith.constant 0 : i32
    return %arg1, %arg0, %c0_i32 : i32, i32, i32
  }
}

</mosaic_0001>

<llo_original>
// kernel: tpu_custom_call.1
$region0: #{tpu_custom_call.1}
  #allocation0 [shape = 'u32[]', space=smem, size = 0x4, offset = 0x4, fixed_abs, tag = 'smem constant byte address 0x4 - core index']
  #allocation1 [shape = 'u32[144,128]{1,0:T(1,128)}', space=vmem, size = 0x12000, scoped, tag = 'internal scratch']
  #allocation2 [shape = 'f32[8,1]{1,0:T(8,128)}', space=vmem, size = 0x1000, scoped, tag = 'scratch operand']
  #allocation3 [shape = 'f32[8,1]{1,0:T(8,128)}', space=vmem, size = 0x1000, scoped, tag = 'scratch operand']
  %s0 = inlined_call_operand.hbm [shape: f32[8,256], index: 0, kind: input, shape index: {}]
  %s1 = inlined_call_operand.hbm [shape: f32[8,256], index: 1, kind: input, shape index: {}]
  %s2 = inlined_call_operand.vmem [shape: f32[2,8,1], index: 2, kind: output, shape index: {0}]
  %s3 = inlined_call_operand.vmem [shape: f32[2,8,1], index: 3, kind: output, shape index: {1}]
  %4 = xla_tuple %s2, %s3
  %s5 = sld [smem:[#allocation0]]
  $region65: #{tpu_custom_call.1} parent=0
    _
  %s7 = ssub.s32 1, %s5
  %s8 = scalar_select 0, %s7, %s5
  $region1: #{tpu_custom_call.1} parent=0
    #allocation4 [shape = 'u8[8192]{0}', space=vmem, size = 0x2000, scoped, tag = 'input window, operand 0']
    #allocation5 [shape = 's32[2]{0}', space=sflag, size = 0x8, scoped, tag = 'scoped memory for tpu_custom_call.1']
    #allocation6 [shape = 'u8[8192]{0}', space=vmem, size = 0x2000, scoped, tag = 'input window, operand 1']
    #allocation7 [shape = 's32[2]{0}', space=sflag, size = 0x8, scoped, tag = 'scoped memory for tpu_custom_call.1']
    %9 = vsyncpa [#allocation5], 0
    %s10 = scalar_lea.sflag [#allocation5], 1
    %11 = vsyncpa %s10, 0
    %12 = vsyncpa [#allocation7], 0
    %s13 = scalar_lea.sflag [#allocation7], 1
    %14 = vsyncpa %s13, 0
    loop: start=0, step=1, limit=4
    $region2: #{tpu_custom_call.1} parent=1 // loop_pre_header
      _
    $region3: #{tpu_custom_call.1} parent=1 // loop_header
      %s16 = sphi 0, %s20
      %p17 = scmp.ge.s32.totalorder %s16, 4
      %s23 = sphi 0, %s42
      %s24 = sphi 0, %s38
      %s25 = sphi 0, %s34
      %s26 = sphi 0, %s23
      %s27 = sphi 0, %s24
      %s28 = sphi 0, %s25
      %s29 = sphi 0, %s26
      %s30 = sphi 0, %s27
      %s31 = sphi 0, %s28
      %s53 = sphi 0, %s55
      %s56 = sphi 0, %s53
      %s57 = sphi 0, %s56
      %s73 = sphi 0, %s57
      %s87 = sphi 0, %s89
      %s90 = sphi 0, %s87
      %s91 = sphi 0, %s90
      %s107 = sphi 0, %s91
      %s115 = sphi 0, %s117
      %s118 = sphi 0, %s115
      %s119 = sphi 0, %s118
      %s135 = sphi 0, %s119
      %s143 = sphi 0, %s145
      %s146 = sphi 0, %s143
      %s147 = sphi 0, %s146
      %s163 = sphi 0, %s147
    $region4: #{tpu_custom_call.1} parent=1 // loop_header_branch
      %19 = sbr.rel (%p17) target = $region8
    $region5: #{tpu_custom_call.1} parent=1 // loop_body
      %s21 = ssub.s32 %s16, 1
      %s22 = ssub.s32 %s16, 2
      %s32 = sadd.s32 1, %s25
      %p33 = scmp.ge.s32.totalorder %s32, 1
      %s34 = scalar_select %p33, 0, %s32
      %s35 = sadd.s32 1, %s24
      %s36 = scalar_select %p33, %s35, %s24
      %p37 = scmp.ge.s32.totalorder %s36, 2
      %s38 = scalar_select %p37, 0, %s36
      %s39 = sadd.s32 1, %s23
      %s40 = scalar_select %p37, %s39, %s23
      %p41 = scmp.ge.s32.totalorder %s40, 1
      %s42 = scalar_select %p41, 0, %s40
      %s43 = sadd.s32 %s24, %s25
      %p44 = scmp.lt.s32.totalorder %s43, 1
      %s45 = scalar_select %p44, %s43, 1
      %s46 = sadd.s32 %s38, %s34
      %p47 = scmp.lt.s32.totalorder %s46, 1
      %s48 = scalar_select %p47, %s46, 1
      %s49 = ssub.s32 %s23, %s42
      %s50 = ssub.s32 %s45, %s48
      %s51 = sor.u32 %s49, %s50
      %p52 = scmp.eq.s32.totalorder %s51, 0
      %s54 = sadd.s32 %s53, 1
      %s55 = scalar_select %p52, %s53, %s54
      %p58 = pneg %p52
      %p59 = scmp.eq.s32.totalorder %s16, 1
      %p60 = por %p58, %p59
      %p61 = scmp.ne.s32.totalorder %s53, %s56
      %p62 = scmp.eq.s32.totalorder %s16, 0
      %p63 = por %p61, %p62
      %p64 = scmp.ne.s32.totalorder %s53, %s56
      %p65 = scmp.eq.s32.totalorder %s21, 1
      %p66 = por %p64, %p65
      %p67 = scmp.ne.s32.totalorder %s56, %s57
      %p68 = scmp.eq.s32.totalorder %s21, 0
      %p69 = por %p67, %p68
      %p70 = scmp.ne.s32.totalorder %s56, %s57
      %p71 = scmp.eq.s32.totalorder %s22, 1
      %p72 = por %p70, %p71
      %p74 = scmp.ne.s32.totalorder %s57, %s73
      %p75 = scmp.eq.s32.totalorder %s22, 0
      %p76 = por %p74, %p75
      %s77 = sadd.s32 %s24, %s25
      %p78 = scmp.lt.s32.totalorder %s77, 1
      %s79 = scalar_select %p78, %s77, 1
      %s80 = sadd.s32 %s38, %s34
      %p81 = scmp.lt.s32.totalorder %s80, 1
      %s82 = scalar_select %p81, %s80, 1
      %s83 = ssub.s32 %s23, %s42
      %s84 = ssub.s32 %s79, %s82
      %s85 = sor.u32 %s83, %s84
      %p86 = scmp.eq.s32.totalorder %s85, 0
      %s88 = sadd.s32 %s87, 1
      %s89 = scalar_select %p86, %s87, %s88
      %p92 = pneg %p86
      %p93 = scmp.eq.s32.totalorder %s16, 1
      %p94 = por %p92, %p93
      %p95 = scmp.ne.s32.totalorder %s87, %s90
      %p96 = scmp.eq.s32.totalorder %s16, 0
      %p97 = por %p95, %p96
      %p98 = scmp.ne.s32.totalorder %s87, %s90
      %p99 = scmp.eq.s32.totalorder %s21, 1
      %p100 = por %p98, %p99
      %p101 = scmp.ne.s32.totalorder %s90, %s91
      %p102 = scmp.eq.s32.totalorder %s21, 0
      %p103 = por %p101, %p102
      %p104 = scmp.ne.s32.totalorder %s90, %s91
      %p105 = scmp.eq.s32.totalorder %s22, 1
      %p106 = por %p104, %p105
      %p108 = scmp.ne.s32.totalorder %s91, %s107
      %p109 = scmp.eq.s32.totalorder %s22, 0
      %p110 = por %p108, %p109
      %s111 = ssub.s32 %s24, %s38
      %s112 = ssub.s32 %s23, %s42
      %s113 = sor.u32 %s111, %s112
      %p114 = scmp.eq.s32.totalorder %s113, 0
      %s116 = sadd.s32 %s115, 1
      %s117 = scalar_select %p114, %s115, %s116
      %p120 = pneg %p114
      %p121 = scmp.eq.s32.totalorder %s16, 1
      %p122 = por %p120, %p121
      %p123 = scmp.ne.s32.totalorder %s115, %s118
      %p124 = scmp.eq.s32.totalorder %s16, 0
      %p125 = por %p123, %p124
      %p126 = scmp.ne.s32.totalorder %s115, %s118
      %p127 = scmp.eq.s32.totalorder %s21, 1
      %p128 = por %p126, %p127
      %p129 = scmp.ne.s32.totalorder %s118, %s119
      %p130 = scmp.eq.s32.totalorder %s21, 0
      %p131 = por %p129, %p130
      %p132 = scmp.ne.s32.totalorder %s118, %s119
      %p133 = scmp.eq.s32.totalorder %s22, 1
      %p134 = por %p132, %p133
      %p136 = scmp.ne.s32.totalorder %s119, %s135
      %p137 = scmp.eq.s32.totalorder %s22, 0
      %p138 = por %p136, %p137
      %s139 = ssub.s32 %s24, %s38
      %s140 = ssub.s32 %s23, %s42
      %s141 = sor.u32 %s139, %s140
      %p142 = scmp.eq.s32.totalorder %s141, 0
      %s144 = sadd.s32 %s143, 1
      %s145 = scalar_select %p142, %s143, %s144
      %p148 = pneg %p142
      %p149 = scmp.eq.s32.totalorder %s16, 1
      %p150 = por %p148, %p149
      %p151 = scmp.ne.s32.totalorder %s143, %s146
      %p152 = scmp.eq.s32.totalorder %s16, 0
      %p153 = por %p151, %p152
      %p154 = scmp.ne.s32.totalorder %s143, %s146
      %p155 = scmp.eq.s32.totalorder %s21, 1
      %p156 = por %p154, %p155
      %p157 = scmp.ne.s32.totalorder %s146, %s147
      %p158 = scmp.eq.s32.totalorder %s21, 0
      %p159 = por %p157, %p158
      %p160 = scmp.ne.s32.totalorder %s146, %s147
      %p161 = scmp.eq.s32.totalorder %s22, 1
      %p162 = por %p160, %p161
      %p164 = scmp.ne.s32.totalorder %s147, %s163
      %p165 = scmp.eq.s32.totalorder %s22, 0
      %p166 = por %p164, %p165
      %p167 = scmp.le.s32.totalorder 1, %s16
      %p168 = scmp.lt.s32.totalorder %s16, 3
      %p169 = pnand %p167, %p168
      %p170 = pneg %p169
      // Predicated region
      $region9: #{tpu_custom_call.1} parent=5 // pred_check
        _
      $region10: #{tpu_custom_call.1} parent=5 // pred_check_branch
        %172 = sbr.rel (%p169) target = $region12
      $region11: #{tpu_custom_call.1} parent=5 // pred_region
        %s173 = ssub.s32 %s16, 1
      $region12: #{tpu_custom_call.1} parent=5 // pred_fallthru
        _
      %p174 = scmp.lt.s32.totalorder %s16, 2
      // Predicated region
      $region13: #{tpu_custom_call.1} parent=5 // pred_check
        %p175 = pneg %p174
      $region14: #{tpu_custom_call.1} parent=5 // pred_check_branch
        %177 = sbr.rel (%p175) target = $region16
      $region15: #{tpu_custom_call.1} parent=5 // pred_region
        // Predicated region
        $region17: #{tpu_custom_call.1} parent=15 // pred_check
          %p178 = pneg %p63
        $region18: #{tpu_custom_call.1} parent=15 // pred_check_branch
          %180 = sbr.rel (%p178) target = $region20
        $region19: #{tpu_custom_call.1} parent=15 // pred_region
          %s181 = sand.u32 %s53, 1
          %s182 = scalar_lea.sflag [#allocation5], %s181
          %s183 = sand.u32 %s53, 1
          %s184 = smul.addr %s183, 8
          %s185 = scalar_lea.vmem [#allocation4], %s184
          %s186 = sadd.s32 %s24, %s25
          %p187 = scmp.lt.s32.totalorder %s186, 1
          %s188 = scalar_select %p187, %s186, 1
          %s190 = ssub.s32 128, 128
          %191 = vsyncadd %s182, %s190
          %s192 = smul.addr %s23, 2
          %s193 = sadd.s32 %s188, %s192
          %s194 = smul.addr %s193, 128
          %s195 = scalar_lea.hbm %s0, %s194
          %s197 = sshll.u32 %s185, 4
          %s198 = int_to_ptr.vmem [resolvable:$true] %s197
          %200 = dma.hbm_to_vmem [thread:$0]  %s195, 128, %s198, %s182
        $region20: #{tpu_custom_call.1} parent=15 // pred_fallthru
          _
        // Predicated region
        $region21: #{tpu_custom_call.1} parent=15 // pred_check
          %p201 = pneg %p97
        $region22: #{tpu_custom_call.1} parent=15 // pred_check_branch
          %203 = sbr.rel (%p201) target = $region24
        $region23: #{tpu_custom_call.1} parent=15 // pred_region
          %s204 = sand.u32 %s87, 1
          %s205 = scalar_lea.sflag [#allocation7], %s204
          %s206 = sand.u32 %s87, 1
          %s207 = smul.addr %s206, 8
          %s208 = scalar_lea.vmem [#allocation6], %s207
          %s209 = sadd.s32 %s24, %s25
          %p210 = scmp.lt.s32.totalorder %s209, 1
          %s211 = scalar_select %p210, %s209, 1
          %s213 = ssub.s32 128, 128
          %214 = vsyncadd %s205, %s213
          %s215 = smul.addr %s23, 2
          %s216 = sadd.s32 %s211, %s215
          %s217 = smul.addr %s216, 128
          %s218 = scalar_lea.hbm %s1, %s217
          %s220 = sshll.u32 %s208, 4
          %s221 = int_to_ptr.vmem [resolvable:$true] %s220
          %223 = dma.hbm_to_vmem [thread:$0]  %s218, 128, %s221, %s205
        $region24: #{tpu_custom_call.1} parent=15 // pred_fallthru
          _
      $region16: #{tpu_custom_call.1} parent=5 // pred_fallthru
        _
      %p224 = scmp.le.s32.totalorder 1, %s16
      %p225 = scmp.lt.s32.totalorder %s16, 3
      %p226 = pnand %p224, %p225
      %p227 = pneg %p226
      // Predicated region
      $region25: #{tpu_custom_call.1} parent=5 // pred_check
        _
      $region26: #{tpu_custom_call.1} parent=5 // pred_check_branch
        %229 = sbr.rel (%p226) target = $region28
      $region27: #{tpu_custom_call.1} parent=5 // pred_region
        %s230 = ssub.s32 %s16, 1
        %s231 = sand.u32 %s56, 1
        %s232 = scalar_lea.sflag [#allocation5], %s231
        %s233 = sand.u32 %s56, 1
        %s234 = smul.addr %s233, 8
        %s235 = scalar_lea.vmem [#allocation4], %s234
        // Predicated region
        $region29: #{tpu_custom_call.1} parent=27 // pred_check
          %p236 = pneg %p69
        $region30: #{tpu_custom_call.1} parent=27 // pred_check_branch
          %238 = sbr.rel (%p236) target = $region32
        $region31: #{tpu_custom_call.1} parent=27 // pred_region
          %239 = dma.done %s232, 128
        $region32: #{tpu_custom_call.1} parent=27 // pred_fallthru
          _
        %s240 = sand.u32 %s90, 1
        %s241 = scalar_lea.sflag [#allocation7], %s240
        %s242 = sand.u32 %s90, 1
        %s243 = smul.addr %s242, 8
        %s244 = scalar_lea.vmem [#allocation6], %s243
        // Predicated region
        $region33: #{tpu_custom_call.1} parent=27 // pred_check
          %p245 = pneg %p103
        $region34: #{tpu_custom_call.1} parent=27 // pred_check_branch
          %247 = sbr.rel (%p245) target = $region36
        $region35: #{tpu_custom_call.1} parent=27 // pred_region
          %248 = dma.done %s241, 128
        $region36: #{tpu_custom_call.1} parent=27 // pred_fallthru
          _
        %s249 = sand.u32 %s56, 1
        %s250 = scalar_lea.sflag [#allocation5], %s249
        %s251 = sand.u32 %s56, 1
        %s252 = smul.addr %s251, 8
        %s253 = scalar_lea.vmem [#allocation4], %s252
        %p254 = pneg %p69
        %p255 = pneg %p66
        %s256 = sand.u32 %s90, 1
        %s257 = scalar_lea.sflag [#allocation7], %s256
        %s258 = sand.u32 %s90, 1
        %s259 = smul.addr %s258, 8
        %s260 = scalar_lea.vmem [#allocation6], %s259
        %p261 = pneg %p103
        %p262 = pneg %p100
        %p263 = pneg %p131
        %p264 = pneg %p128
        %p265 = scmp.lt.s32.totalorder %s27, 1
        %s266 = scalar_select %p265, %s27, 1
        %p267 = scmp.lt.s32.totalorder %s26, 0
        %s268 = scalar_select %p267, %s26, 0
        %s269 = sadd.s32 %s268, %s266
        %s270 = smul.addr %s269, 8
        %s271 = scalar_lea.vmem %s2, %s270
        %p272 = pneg %p159
        %p273 = pneg %p156
        %p274 = scmp.lt.s32.totalorder %s27, 1
        %s275 = scalar_select %p274, %s27, 1
        %p276 = scmp.lt.s32.totalorder %s26, 0
        %s277 = scalar_select %p276, %s26, 0
        %s278 = sadd.s32 %s277, %s275
        %s279 = smul.addr %s278, 8
        %s280 = scalar_lea.vmem %s3, %s279
        %s281 = sadd.s32 %s27, %s28
        %p282 = scmp.lt.s32.totalorder %s281, 1
        %s283 = scalar_select %p282, %s281, 1
        %s284 = sadd.s32 %s27, %s28
        %p285 = scmp.lt.s32.totalorder %s284, 1
        %s286 = scalar_select %p285, %s284, 1
        %p287 = scmp.lt.s32.totalorder %s27, 1
        %s288 = scalar_select %p287, %s27, 1
        %p289 = scmp.lt.s32.totalorder %s26, 0
        %s290 = scalar_select %p289, %s26, 0
        %s291 = sadd.s32 %s290, %s288
        %s292 = smul.addr %s291, 8
        %s293 = scalar_lea.vmem %s2, %s292
        %p294 = scmp.lt.s32.totalorder %s27, 1
        %s295 = scalar_select %p294, %s27, 1
        %p296 = scmp.lt.s32.totalorder %s26, 0
        %s297 = scalar_select %p296, %s26, 0
        %s298 = sadd.s32 %s297, %s295
        %s299 = smul.addr %s298, 8
        %s300 = scalar_lea.vmem %s3, %s299
        %p301 = scmp.eq.s32.totalorder %s28, 0
        // Predicated region
        $region37: #{tpu_custom_call.1} parent=27 // pred_check
          %p302 = pneg %p301
        $region38: #{tpu_custom_call.1} parent=27 // pred_check_branch
          %304 = sbr.rel (%p302) target = $region40
        $region39: #{tpu_custom_call.1} parent=27 // pred_region
          %vm305 = vcmask 7168
          %306 = vst.msk [vmem:[#allocation2] sm:$0xff] %vm305, 0.0
          %307 = vst.msk [vmem:[#allocation3] sm:$0xff] %vm305, 0.0
        $region40: #{tpu_custom_call.1} parent=27 // pred_fallthru
          _
        %v308 = vld [vmem:[%s235] sm:$0xff]
        %v309 = vld [vmem:[%s244] sm:$0xff]
        %vm310 = vcmp.ge.f32.partialorder %v308, 0.0
        %v311 = vld [vmem:[#allocation2] sm:$0xff]
        %v312 = vsel %vm310, %v309, 0.0
        %313 = vadd.xlane.f32.xlu0 %v312
        %v314 = vpop.xlane.xlu0 %313
        %v315 = vadd.f32 %v311, %v314
        %vm316 = vcmask 7168
        %317 = vst.msk [vmem:[#allocation2] sm:$0xff] %vm316, %v315
        %v318 = vld [vmem:[#allocation3] sm:$0xff]
        %319 = vadd.xlane.f32.xlu0 %v309
        %v320 = vpop.xlane.xlu0 %319
        %v321 = vsel %vm310, 1, 0
        %v322 = vcvt.s32.f32 %v321
        %323 = vadd.xlane.f32.xlu0 %v322
        %v324 = vpop.xlane.xlu0 %323
        %v325 = vadd.f32 %v320, %v324
        %v326 = vadd.f32 %v318, %v325
        %327 = vst.msk [vmem:[#allocation3] sm:$0xff] %vm316, %v326
        // Predicated region
        $region41: #{tpu_custom_call.1} parent=27 // pred_check
          %p328 = pneg %p301
        $region42: #{tpu_custom_call.1} parent=27 // pred_check_branch
          %330 = sbr.rel (%p328) target = $region44
        $region43: #{tpu_custom_call.1} parent=27 // pred_region
          %v331 = vld [vmem:[#allocation2] sm:$0xff]
          %332 = vst.msk [vmem:[%s293] sm:$0xff] %vm316, %v331
          %v333 = vld [vmem:[#allocation3] sm:$0xff]
          %334 = vst.msk [vmem:[%s300] sm:$0xff] %vm316, %v333
        $region44: #{tpu_custom_call.1} parent=27 // pred_fallthru
          _
        %p335 = scmp.lt.s32.totalorder %s27, 1
        %s336 = scalar_select %p335, %s27, 1
        %p337 = scmp.lt.s32.totalorder %s26, 0
        %s338 = scalar_select %p337, %s26, 0
        %s339 = sadd.s32 %s338, %s336
        %s340 = smul.addr %s339, 8
        %s341 = scalar_lea.vmem %s2, %s340
        %p342 = scmp.lt.s32.totalorder %s27, 1
        %s343 = scalar_select %p342, %s27, 1
        %p344 = scmp.lt.s32.totalorder %s26, 0
        %s345 = scalar_select %p344, %s26, 0
        %s346 = sadd.s32 %s345, %s343
        %s347 = smul.addr %s346, 8
        %s348 = scalar_lea.vmem %s3, %s347
        // Predicated region
        $region45: #{tpu_custom_call.1} parent=27 // pred_check
          %p349 = pneg %p128
        $region46: #{tpu_custom_call.1} parent=27 // pred_check_branch
          %351 = sbr.rel (%p349) target = $region48
        $region47: #{tpu_custom_call.1} parent=27 // pred_region
          _
        $region48: #{tpu_custom_call.1} parent=27 // pred_fallthru
          _
        // Predicated region
        $region49: #{tpu_custom_call.1} parent=27 // pred_check
          %p352 = pneg %p156
        $region50: #{tpu_custom_call.1} parent=27 // pred_check_branch
          %354 = sbr.rel (%p352) target = $region52
        $region51: #{tpu_custom_call.1} parent=27 // pred_region
          _
        $region52: #{tpu_custom_call.1} parent=27 // pred_fallthru
          _
      $region28: #{tpu_custom_call.1} parent=5 // pred_fallthru
        _
      %p355 = scmp.le.s32.totalorder 2, %s16
      // Predicated region
      $region53: #{tpu_custom_call.1} parent=5 // pred_check
        %p356 = pneg %p355
      $region54: #{tpu_custom_call.1} parent=5 // pred_check_branch
        %358 = sbr.rel (%p356) target = $region56
      $region55: #{tpu_custom_call.1} parent=5 // pred_region
        %s359 = ssub.s32 %s16, 2
        // Predicated region
        $region57: #{tpu_custom_call.1} parent=55 // pred_check
          %p360 = pneg %p134
        $region58: #{tpu_custom_call.1} parent=55 // pred_check_branch
          %362 = sbr.rel (%p360) target = $region60
        $region59: #{tpu_custom_call.1} parent=55 // pred_region
          %p363 = scmp.lt.s32.totalorder %s30, 1
          %s364 = scalar_select %p363, %s30, 1
          %p365 = scmp.lt.s32.totalorder %s29, 0
          %s366 = scalar_select %p365, %s29, 0
          %s367 = sadd.s32 %s366, %s364
          %s368 = smul.addr %s367, 8
          %s369 = scalar_lea.vmem %s2, %s368
        $region60: #{tpu_custom_call.1} parent=55 // pred_fallthru
          _
        // Predicated region
        $region61: #{tpu_custom_call.1} parent=55 // pred_check
          %p370 = pneg %p162
        $region62: #{tpu_custom_call.1} parent=55 // pred_check_branch
          %372 = sbr.rel (%p370) target = $region64
        $region63: #{tpu_custom_call.1} parent=55 // pred_region
          %p373 = scmp.lt.s32.totalorder %s30, 1
          %s374 = scalar_select %p373, %s30, 1
          %p375 = scmp.lt.s32.totalorder %s29, 0
          %s376 = scalar_select %p375, %s29, 0
          %s377 = sadd.s32 %s376, %s374
          %s378 = smul.addr %s377, 8
          %s379 = scalar_lea.vmem %s3, %s378
        $region64: #{tpu_custom_call.1} parent=55 // pred_fallthru
          _
      $region56: #{tpu_custom_call.1} parent=5 // pred_fallthru
        _
    $region6: #{tpu_custom_call.1} parent=1 // loop_footer
      %s20 = sadd.s32 1, %s16
    $region7: #{tpu_custom_call.1} parent=1 // loop_footer_branch
      %15 = sbr.rel target = $region3
    $region8: #{tpu_custom_call.1} parent=1 // loop_exit
      _
    %380 = vsyncpa [#allocation5], 1
    %s381 = scalar_lea.sflag [#allocation5], 1
    %382 = vsyncpa %s381, 1
    %383 = vsyncpa [#allocation7], 1
    %s384 = scalar_lea.sflag [#allocation7], 1
    %385 = vsyncpa %s384, 1

</llo_original>
